<compile_context>
chip_gen: v5e
topology: v5e:2x2
jax: 0.10.0
libtpu: 0.0.40
codegen_flags: <defaults>
</compile_context>

<pallas_src>
import jax
import jax.numpy as jnp
from jax import lax
from jax.experimental import pallas as pl
from jax.experimental.pallas import tpu as pltpu


# ----------------------------------------------------------------------------
# Kernel: one batch chunk per grid step, fully in VMEM.
# ----------------------------------------------------------------------------
def _downsample_a_kernel(x_ref, o_ref):
    # x_ref: (nb, C*Ho, 2*W)   batch chunk, H-row pairs packed on the lane axis
    # o_ref: (nb, 2*C*Ho, Wo)  rows [0, C*Ho) = subsampled x, rows [C*Ho, 2*C*Ho) = 0
    nb, rows, k2 = x_ref.shape
    w = k2 // 2
    wo = o_ref.shape[-1]
    dt = x_ref.dtype

    # One-hot selector sel[k, j] = 1 iff k == 2*j (pick lane 2*j of the kept H-row).
    k_idx = lax.broadcasted_iota(jnp.int32, (k2, wo), 0)
    j_idx = lax.broadcasted_iota(jnp.int32, (k2, wo), 1)
    sel = (k_idx == 2 * j_idx).astype(dt)

    # Keep-mask over lanes: even lane index within the first (kept) H-row.  Zeroing
    # the dropped lanes first makes NaN/Inf propagation match a strided slice.
    lane = lax.broadcasted_iota(jnp.int32, (rows, k2), 1)
    keep = (lane < w) & (lane % 2 == 0)

    zeros_half = jnp.zeros((rows, wo), o_ref.dtype)
    for i in range(nb):  # nb is a small trace-time constant (<= 8)
        xi = jnp.where(keep, x_ref[i], 0)
        sub = jnp.dot(xi, sel,
                      preferred_element_type=jnp.float32,
                      precision=lax.Precision.HIGHEST)   # exact one-hot gather
        o_ref[i, :rows, :] = sub.astype(o_ref.dtype)      # real channels
        o_ref[i, rows:, :] = zeros_half                   # zero-padded channels


# ----------------------------------------------------------------------------
# Wrapper: NCHW in, NCHW out (matches the PyTorch module).
# ----------------------------------------------------------------------------
def downsample_a(x, *, batch_block=None):
    """DownsampleA.forward: AvgPool2d(k=1, s=2) then concat zero channels.

    x: (N, C, H, W)  ->  (N, 2*C, H//2, W//2)
    """
    N, C, H, W = x.shape
    assert H % 2 == 0 and W % 2 == 0, "stride-2 subsample expects even spatial dims"
    Ho, Wo = H // 2, W // 2
    rows = C * Ho            # kept rows per image, (c, ho) c-major
    K = 2 * W                # lane width of the packed input view

    # Images per grid step: keep >= 2 steps when N >= 2 (megacore), cap the input
    # block at ~2 MB and at 8 images (the unrolled in-kernel loop stays small).
    if batch_block is None:
        per_img = C * H * W * x.dtype.itemsize
        batch_block = 1
        for d in range(1, N + 1):
            if N % d != 0 or d > 8:
                continue
            if N >= 2 and N // d < 2:
                continue
            if d * per_img > (2 << 20):
                continue
            batch_block = d
    nb = batch_block
    grid = (N // nb,)

    # Free (metadata-only) reshape: H-row pairs packed onto the lane axis.
    x_view = x.reshape(N, rows, K)

    out_view = pl.pallas_call(
        _downsample_a_kernel,
        grid=grid,
        in_specs=[pl.BlockSpec((nb, rows, K), lambda n: (n, 0, 0))],
        out_specs=pl.BlockSpec((nb, 2 * rows, Wo), lambda n: (n, 0, 0)),
        out_shape=jax.ShapeDtypeStruct((N, 2 * rows, Wo), x.dtype),
        compiler_params=pltpu.CompilerParams(
            dimension_semantics=("parallel",)),
    )(x_view)

    # Free reshape back to NCHW: rows [0, C*Ho) -> channels [0, C), rest -> zeros.
    return out_view.reshape(N, 2 * C, Ho, Wo)


if __name__ == "__main__":
    key = jax.random.PRNGKey(0)
    # Small NCHW input consistent with the module: batch=2, channels=4, 16x16.
    x = jax.random.normal(key, (2, 4, 16, 16), jnp.float32)

    out = jax.block_until_ready(downsample_a(x))

    # Pure-JAX reference: avgpool(k=1, s=2) == x[:, :, ::2, ::2]; concat zero channels.
    sub = x[:, :, ::2, ::2]
    ref = jnp.concatenate([sub, jnp.zeros_like(sub)], axis=1)

    assert out.shape == (2, 8, 8, 8), out.shape
    assert out.dtype == jnp.float32
    assert bool(jnp.all(out[:, 4:] == 0))
    assert bool(jnp.allclose(out, ref, rtol=1e-2, atol=1e-2)), \
        float(jnp.max(jnp.abs(out - ref)))
    print("KERNEL_OK")
</pallas_src>

<mosaic_0001>
module attributes {stable_mosaic.version = 11 : i64} {
  func.func @_downsample_a_kernel(%arg0: i32, %arg1: memref<1x32x32xf32, #tpu.memory_space<vmem>>, %arg2: memref<1x64x8xf32, #tpu.memory_space<vmem>>) attributes {dimension_semantics = [#tpu.dimension_semantics<parallel>], iteration_bounds = array<i64: 2>, scalar_prefetch = 0 : i64, scratch_operands = 0 : i64, tpu.core_type = #tpu.core_type<tc>, window_params = [{transform_indices = @transform_0, window_bounds = array<i64: 1, 32, 32>}, {transform_indices = @transform_1, window_bounds = array<i64: 1, 64, 8>}]} {
    %0 = tpu.iota {dimensions = array<i32: 0>} : vector<32x8xi32>
    %1 = tpu.iota {dimensions = array<i32: 1>} : vector<32x8xi32>
    %c2_i32 = arith.constant 2 : i32
    %2 = vector.broadcast %c2_i32 : i32 to vector<32x8xi32>
    %3 = arith.muli %2, %1 : vector<32x8xi32>
    %4 = arith.cmpi eq, %0, %3 : vector<32x8xi32>
    %5 = arith.extui %4 : vector<32x8xi1> to vector<32x8xi32>
    %6 = arith.sitofp %5 : vector<32x8xi32> to vector<32x8xf32>
    %7 = tpu.iota {dimensions = array<i32: 1>} : vector<32x32xi32>
    %c16_i32 = arith.constant 16 : i32
    %8 = vector.broadcast %c16_i32 : i32 to vector<32x32xi32>
    %9 = arith.cmpi slt, %7, %8 : vector<32x32xi32>
    %c2_i32_0 = arith.constant 2 : i32
    %c0_i32 = arith.constant 0 : i32
    %10 = arith.cmpi eq, %c2_i32_0, %c0_i32 : i32
    %c1_i32 = arith.constant 1 : i32
    %11 = arith.select %10, %c1_i32, %c2_i32_0 : i32
    %12 = vector.broadcast %11 : i32 to vector<32x32xi32>
    %13 = arith.remsi %7, %12 : vector<32x32xi32>
    %c0_i32_1 = arith.constant 0 : i32
    %14 = vector.broadcast %c0_i32_1 : i32 to vector<32x32xi32>
    %15 = arith.cmpi ne, %13, %14 : vector<32x32xi32>
    %c0_i32_2 = arith.constant 0 : i32
    %16 = vector.broadcast %c0_i32_2 : i32 to vector<32x32xi32>
    %17 = arith.cmpi slt, %13, %16 : vector<32x32xi32>
    %c0_i32_3 = arith.constant 0 : i32
    %18 = arith.cmpi slt, %11, %c0_i32_3 : i32
    %19 = vector.broadcast %18 : i1 to vector<32x32xi1>
    %20 = vector.broadcast %19 : vector<32x32xi1> to vector<32x32xi1>
    %21 = arith.xori %17, %20 : vector<32x32xi1>
    %22 = arith.andi %21, %15 : vector<32x32xi1>
    %23 = vector.broadcast %11 : i32 to vector<32x32xi32>
    %24 = arith.addi %13, %23 : vector<32x32xi32>
    %25 = arith.select %22, %24, %13 : vector<32x32xi1>, vector<32x32xi32>
    %c0_i32_4 = arith.constant 0 : i32
    %26 = vector.broadcast %c0_i32_4 : i32 to vector<32x32xi32>
    %27 = arith.cmpi eq, %25, %26 : vector<32x32xi32>
    %28 = arith.andi %9, %27 : vector<32x32xi1>
    %cst = arith.constant 0.000000e+00 : f32
    %29 = vector.broadcast %cst : f32 to vector<32x8xf32>
    %c0 = arith.constant 0 : index
    %c0_5 = arith.constant 0 : index
    %c0_6 = arith.constant 0 : index
    %30 = vector.load %arg1[%c0, %c0_5, %c0_6] : memref<1x32x32xf32, #tpu.memory_space<vmem>>, vector<1x32x32xf32>
    %31 = vector.shape_cast %30 : vector<1x32x32xf32> to vector<32x32xf32>
    %c0_i32_7 = arith.constant 0 : i32
    %32 = arith.sitofp %c0_i32_7 : i32 to f32
    %33 = vector.broadcast %32 : f32 to vector<32x32xf32>
    %34 = arith.select %28, %31, %33 : vector<32x32xi1>, vector<32x32xf32>
    %cst_8 = arith.constant dense<0.000000e+00> : vector<32x8xf32>
    %35 = tpu.matmul %34, %6, %cst_8 {dimension_numbers = #tpu.dot_dimension_numbers<[1], [0], [0], [1], [0, 0, 1, 1], [], []>, precision = #tpu.contract_precision<fp32>} : vector<32x32xf32>, vector<32x8xf32>, vector<32x8xf32> -> vector<32x8xf32>
    %c0_9 = arith.constant 0 : index
    %c0_10 = arith.constant 0 : index
    %c0_11 = arith.constant 0 : index
    %36 = vector.load %arg2[%c0_9, %c0_10, %c0_11] : memref<1x64x8xf32, #tpu.memory_space<vmem>>, vector<1x32x8xf32>
    %37 = vector.shape_cast %36 : vector<1x32x8xf32> to vector<32x8xf32>
    %38 = vector.shape_cast %35 : vector<32x8xf32> to vector<1x32x8xf32>
    tpu.vector_store %arg2[%c0_9, %c0_10, %c0_11], %38 {strides = array<i32>} : memref<1x64x8xf32, #tpu.memory_space<vmem>>, vector<1x32x8xf32>,
    %c0_12 = arith.constant 0 : index
    %c32 = arith.constant 32 : index
    %c0_13 = arith.constant 0 : index
    %39 = vector.load %arg2[%c0_12, %c32, %c0_13] : memref<1x64x8xf32, #tpu.memory_space<vmem>>, vector<1x32x8xf32>
    %40 = vector.shape_cast %39 : vector<1x32x8xf32> to vector<32x8xf32>
    %41 = vector.shape_cast %29 : vector<32x8xf32> to vector<1x32x8xf32>
    tpu.vector_store %arg2[%c0_12, %c32, %c0_13], %41 {strides = array<i32>} : memref<1x64x8xf32, #tpu.memory_space<vmem>>, vector<1x32x8xf32>,
    return
  }
  func.func @transform_0(%arg0: i32) -> (i32, i32, i32) {
    %c0_i32 = arith.constant 0 : i32
    %c0_i32_0 = arith.constant 0 : i32
    %c0_i32_1 = arith.constant 0 : i32
    return %arg0, %c0_i32, %c0_i32_0 : i32, i32, i32
  }
  func.func @transform_1(%arg0: i32) -> (i32, i32, i32) {
    %c0_i32 = arith.constant 0 : i32
    %c0_i32_0 = arith.constant 0 : i32
    %c0_i32_1 = arith.constant 0 : i32
    return %arg0, %c0_i32, %c0_i32_0 : i32, i32, i32
  }
}

</mosaic_0001>

<llo_original>
// kernel: tpu_custom_call.1
$region0: #{tpu_custom_call.1}
  #allocation0 [shape = 'u32[]', space=smem, size = 0x4, offset = 0x4, fixed_abs, tag = 'smem constant byte address 0x4 - core index']
  #allocation1 [shape = 'u32[72,128]{1,0:T(1,128)}', space=vmem, size = 0x9000, scoped, tag = 'internal scratch']
  %s0 = inlined_call_operand.hbm [shape: f32[2,32,32], index: 0, kind: input, shape index: {}]
  %s1 = inlined_call_operand.vmem [shape: f32[2,64,8], index: 1, kind: output, shape index: {}]
  %s2 = sld [smem:[#allocation0]]
  $region41: #{tpu_custom_call.1} parent=0
    _
  %s4 = ssub.s32 1, %s2
  %s5 = scalar_select 0, %s4, %s2
  $region1: #{tpu_custom_call.1} parent=0
    #allocation2 [shape = 'u8[32768]{0}', space=vmem, size = 0x8000, scoped, tag = 'input window, operand 0']
    #allocation3 [shape = 's32[2]{0}', space=sflag, size = 0x8, scoped, tag = 'scoped memory for tpu_custom_call.1']
    %6 = vsyncpa [#allocation3], 0
    %s7 = scalar_lea.sflag [#allocation3], 1
    %8 = vsyncpa %s7, 0
    loop: start=0, step=1, limit=4
    $region2: #{tpu_custom_call.1} parent=1 // loop_pre_header
      _
    $region3: #{tpu_custom_call.1} parent=1 // loop_header
      %s10 = sphi 0, %s14
      %p11 = scmp.ge.s32.totalorder %s10, 4
      %s20 = sphi 0, %s22
      %s23 = sphi 0, %s20
      %s24 = sphi 0, %s23
      %s40 = sphi 0, %s24
      %s46 = sphi 0, %s48
      %s49 = sphi 0, %s46
      %s50 = sphi 0, %s49
      %s66 = sphi 0, %s50
    $region4: #{tpu_custom_call.1} parent=1 // loop_header_branch
      %13 = sbr.rel (%p11) target = $region8
    $region5: #{tpu_custom_call.1} parent=1 // loop_body
      %s15 = ssub.s32 %s10, 1
      %s16 = ssub.s32 %s10, 2
      %s17 = sadd.s32 %s10, 1
      %s18 = ssub.s32 %s10, %s17
      %p19 = scmp.eq.s32.totalorder %s18, 0
      %s21 = sadd.s32 %s20, 1
      %s22 = scalar_select %p19, %s20, %s21
      %p25 = pneg %p19
      %p26 = scmp.eq.s32.totalorder %s10, 1
      %p27 = por %p25, %p26
      %p28 = scmp.ne.s32.totalorder %s20, %s23
      %p29 = scmp.eq.s32.totalorder %s10, 0
      %p30 = por %p28, %p29
      %p31 = scmp.ne.s32.totalorder %s20, %s23
      %p32 = scmp.eq.s32.totalorder %s15, 1
      %p33 = por %p31, %p32
      %p34 = scmp.ne.s32.totalorder %s23, %s24
      %p35 = scmp.eq.s32.totalorder %s15, 0
      %p36 = por %p34, %p35
      %p37 = scmp.ne.s32.totalorder %s23, %s24
      %p38 = scmp.eq.s32.totalorder %s16, 1
      %p39 = por %p37, %p38
      %p41 = scmp.ne.s32.totalorder %s24, %s40
      %p42 = scmp.eq.s32.totalorder %s16, 0
      %p43 = por %p41, %p42
      %s44 = ssub.s32 %s10, %s17
      %p45 = scmp.eq.s32.totalorder %s44, 0
      %s47 = sadd.s32 %s46, 1
      %s48 = scalar_select %p45, %s46, %s47
      %p51 = pneg %p45
      %p52 = scmp.eq.s32.totalorder %s10, 1
      %p53 = por %p51, %p52
      %p54 = scmp.ne.s32.totalorder %s46, %s49
      %p55 = scmp.eq.s32.totalorder %s10, 0
      %p56 = por %p54, %p55
      %p57 = scmp.ne.s32.totalorder %s46, %s49
      %p58 = scmp.eq.s32.totalorder %s15, 1
      %p59 = por %p57, %p58
      %p60 = scmp.ne.s32.totalorder %s49, %s50
      %p61 = scmp.eq.s32.totalorder %s15, 0
      %p62 = por %p60, %p61
      %p63 = scmp.ne.s32.totalorder %s49, %s50
      %p64 = scmp.eq.s32.totalorder %s16, 1
      %p65 = por %p63, %p64
      %p67 = scmp.ne.s32.totalorder %s50, %s66
      %p68 = scmp.eq.s32.totalorder %s16, 0
      %p69 = por %p67, %p68
      %p70 = scmp.le.s32.totalorder 1, %s10
      %p71 = scmp.lt.s32.totalorder %s10, 3
      %p72 = pnand %p70, %p71
      %p73 = pneg %p72
      // Predicated region
      $region9: #{tpu_custom_call.1} parent=5 // pred_check
        _
      $region10: #{tpu_custom_call.1} parent=5 // pred_check_branch
        %75 = sbr.rel (%p72) target = $region12
      $region11: #{tpu_custom_call.1} parent=5 // pred_region
        %s76 = ssub.s32 %s10, 1
      $region12: #{tpu_custom_call.1} parent=5 // pred_fallthru
        _
      %p77 = scmp.lt.s32.totalorder %s10, 2
      // Predicated region
      $region13: #{tpu_custom_call.1} parent=5 // pred_check
        %p78 = pneg %p77
      $region14: #{tpu_custom_call.1} parent=5 // pred_check_branch
        %80 = sbr.rel (%p78) target = $region16
      $region15: #{tpu_custom_call.1} parent=5 // pred_region
        // Predicated region
        $region17: #{tpu_custom_call.1} parent=15 // pred_check
          %p81 = pneg %p30
        $region18: #{tpu_custom_call.1} parent=15 // pred_check_branch
          %83 = sbr.rel (%p81) target = $region20
        $region19: #{tpu_custom_call.1} parent=15 // pred_region
          %s84 = sand.u32 %s20, 1
          %s85 = scalar_lea.sflag [#allocation3], %s84
          %s86 = sand.u32 %s20, 1
          %s87 = smul.addr %s86, 32
          %s88 = scalar_lea.vmem [#allocation2], %s87
          %90 = vsyncadd %s85, 0
          %s91 = smul.addr %s10, 4
          %s92 = smul.addr %s91, 8
          %s93 = scalar_lea.hbm %s0, %s92
          %s94 = sshll.u32 %s93, 4
          %s95 = int_to_ptr.hbm [resolvable:$true] %s94
          %s96 = sshll.u32 %s88, 4
          %s97 = int_to_ptr.vmem [resolvable:$true] %s96
          %102 = dma.hbm_to_vmem [thread:$0]  %s95, 512, %s97, %s85, 128, 128, 8
        $region20: #{tpu_custom_call.1} parent=15 // pred_fallthru
          _
      $region16: #{tpu_custom_call.1} parent=5 // pred_fallthru
        _
      %p103 = scmp.le.s32.totalorder 1, %s10
      %p104 = scmp.lt.s32.totalorder %s10, 3
      %p105 = pnand %p103, %p104
      %p106 = pneg %p105
      // Predicated region
      $region21: #{tpu_custom_call.1} parent=5 // pred_check
        _
      $region22: #{tpu_custom_call.1} parent=5 // pred_check_branch
        %108 = sbr.rel (%p105) target = $region24
      $region23: #{tpu_custom_call.1} parent=5 // pred_region
        %s109 = ssub.s32 %s10, 1
        %s110 = sand.u32 %s23, 1
        %s111 = scalar_lea.sflag [#allocation3], %s110
        %s112 = sand.u32 %s23, 1
        %s113 = smul.addr %s112, 32
        %s114 = scalar_lea.vmem [#allocation2], %s113
        // Predicated region
        $region25: #{tpu_custom_call.1} parent=23 // pred_check
          %p115 = pneg %p36
        $region26: #{tpu_custom_call.1} parent=23 // pred_check_branch
          %117 = sbr.rel (%p115) target = $region28
        $region27: #{tpu_custom_call.1} parent=23 // pred_region
          %119 = dma.done %s111, 512
        $region28: #{tpu_custom_call.1} parent=23 // pred_fallthru
          _
        %s120 = sand.u32 %s23, 1
        %s121 = scalar_lea.sflag [#allocation3], %s120
        %s122 = sand.u32 %s23, 1
        %s123 = smul.addr %s122, 32
        %s124 = scalar_lea.vmem [#allocation2], %s123
        %p125 = pneg %p36
        %p126 = pneg %p33
        %p127 = pneg %p62
        %p128 = pneg %p59
        %p129 = scmp.lt.s32.totalorder %s15, 1
        %s130 = scalar_select %p129, %s15, 1
        %s131 = smul.addr %s130, 8
        %s132 = smul.addr %s131, 8
        %s133 = scalar_lea.vmem %s1, %s132
        %p134 = scmp.lt.s32.totalorder %s15, 1
        %s135 = scalar_select %p134, %s15, 1
        %s136 = smul.addr %s135, 8
        %s137 = smul.addr %s136, 8
        %s138 = scalar_lea.vmem %s1, %s137
        %v139 = vlaneseq
        %v140 = vshrl.u32 %v139, 7
        %v141 = vadd.s32 %v140, 8
        %v142 = vadd.s32 %v140, 16
        %v143 = vadd.s32 %v140, 24
        %v144 = vlaneseq
        %v145 = vand.u32 %v144, 127
        %v146 = vmul.u32 %v145, 2
        %vm147 = vcmp.eq.s32.totalorder %v140, %v146
        %vm148 = vcmp.eq.s32.totalorder %v141, %v146
        %vm149 = vcmp.eq.s32.totalorder %v142, %v146
        %vm150 = vcmp.eq.s32.totalorder %v143, %v146
        %v151 = vsel %vm147, 1, 0
        %v152 = vsel %vm148, 1, 0
        %v153 = vsel %vm149, 1, 0
        %v154 = vsel %vm150, 1, 0
        %v155 = vcvt.s32.f32 %v151
        %v156 = vcvt.s32.f32 %v152
        %v157 = vcvt.s32.f32 %v153
        %v158 = vcvt.s32.f32 %v154
        %vm159 = vcmp.lt.s32.totalorder %v145, 16
        %vm160 = vcmp.lt.s32.totalorder %v145, 0
        %v161 = vsub.s32 0, %v145
        %v162 = vsel %vm160, %v161, %v145
        %v163 = vshrl.u32 %v162, 1
        %v164 = vand.u32 %v162, 1
        %v165 = vsub.s32 0, %v164
        %v166 = vsel %vm160, %v165, %v164
        %vm167 = vcmp.ne.s32.totalorder %v166, 0
        %vm168 = vcmp.lt.s32.totalorder %v166, 0
        %vm169 = vmand %vm168, %vm167
        %v170 = vadd.s32 %v166, 2
        %v171 = vsel %vm169, %v170, %v166
        %vm172 = vcmp.eq.s32.totalorder %v171, 0
        %vm173 = vmand %vm159, %vm172
        %v174 = vld [vmem:[%s114] sm:$0xff]
        %v175 = vld [vmem:[%s114 + $0x8] sm:$0xff]
        %v176 = vld [vmem:[%s114 + $0x10] sm:$0xff]
        %v177 = vld [vmem:[%s114 + $0x18] sm:$0xff]
        %v178 = vsel %vm173, %v174, 0.0
        %v179 = vsel %vm173, %v175, 0.0
        %v180 = vsel %vm173, %v176, 0.0
        %v181 = vsel %vm173, %v177, 0.0
        %vm182 = vcmask 261120
        %v184 = vsel %vm182, %v178, 0
        %v187 = vsel %vm182, %v179, 0
        %v190 = vsel %vm182, %v180, 0
        %v193 = vsel %vm182, %v181, 0
        %195 = vmatpush.msra.mxu0 0.0
        %196 = vmatpush.msra.mxu0 0.0
        %197 = vmatpush.msra.mxu0 0.0
        %198 = vmatpush.msra.mxu0 0.0
        %199 = vmatpush.msra.mxu0 0.0
        %200 = vmatpush.msra.mxu0 0.0
        %201 = vmatpush.msra.mxu0 0.0
        %202 = vmatpush.msra.mxu0 0.0
        %203 = vmatpush.msra.mxu0 0.0
        %204 = vmatpush.msra.mxu0 0.0
        %205 = vmatpush.msra.mxu0 0.0
        %206 = vmatpush.msra.mxu0 0.0
        %v207 = vand.u32 %v158, 4294901760
        %208 = vmatpush.msra.mxu0 %v207
        %v209 = vand.u32 %v157, 4294901760
        %210 = vmatpush.msra.mxu0 %v209
        %v211 = vand.u32 %v156, 4294901760
        %212 = vmatpush.msra.mxu0 %v211
        %v213 = vand.u32 %v155, 4294901760
        %214 = vmatpush.msra.mxu0 %v213
        %v215 = vand.u32 %v184, 4294901760
        %v216 = vsub.f32 %v184, %v215
        %v217 = vand.u32 %v216, 4294901760
        %v218 = vsub.f32 %v216, %v217
        %v219 = vand.u32 %v218, 4294901760
        %220 = vmatmul.f32.gmra.mxu0 %v219
        %v221 = vpop.f32.mrf.mxu0
        %v222 = vadd.f32 0.0, %v221
        %v223 = vand.u32 %v187, 4294901760
        %v224 = vsub.f32 %v187, %v223
        %v225 = vand.u32 %v224, 4294901760
        %v226 = vsub.f32 %v224, %v225
        %v227 = vand.u32 %v226, 4294901760
        %228 = vmatmul.f32.gmra.mxu0 %v227
        %v229 = vpop.f32.mrf.mxu0
        %v230 = vadd.f32 0.0, %v229
        %v231 = vand.u32 %v190, 4294901760
        %v232 = vsub.f32 %v190, %v231
        %v233 = vand.u32 %v232, 4294901760
        %v234 = vsub.f32 %v232, %v233
        %v235 = vand.u32 %v234, 4294901760
        %236 = vmatmul.f32.gmra.mxu0 %v235
        %v237 = vpop.f32.mrf.mxu0
        %v238 = vadd.f32 0.0, %v237
        %v239 = vand.u32 %v193, 4294901760
        %v240 = vsub.f32 %v193, %v239
        %v241 = vand.u32 %v240, 4294901760
        %v242 = vsub.f32 %v240, %v241
        %v243 = vand.u32 %v242, 4294901760
        %244 = vmatmul.f32.gmra.mxu0 %v243
        %v245 = vpop.f32.mrf.mxu0
        %v246 = vadd.f32 0.0, %v245
        %247 = vdwg.mxu0
        %248 = vmatpush.msra.mxu0 0.0
        %249 = vmatpush.msra.mxu0 0.0
        %250 = vmatpush.msra.mxu0 0.0
        %251 = vmatpush.msra.mxu0 0.0
        %252 = vmatpush.msra.mxu0 0.0
        %253 = vmatpush.msra.mxu0 0.0
        %254 = vmatpush.msra.mxu0 0.0
        %255 = vmatpush.msra.mxu0 0.0
        %256 = vmatpush.msra.mxu0 0.0
        %257 = vmatpush.msra.mxu0 0.0
        %258 = vmatpush.msra.mxu0 0.0
        %259 = vmatpush.msra.mxu0 0.0
        %v260 = vand.u32 %v158, 4294901760
        %v261 = vsub.f32 %v158, %v260
        %v262 = vand.u32 %v261, 4294901760
        %v263 = vsub.f32 %v261, %v262
        %v264 = vand.u32 %v263, 4294901760
        %265 = vmatpush.msra.mxu0 %v264
        %v266 = vand.u32 %v157, 4294901760
        %v267 = vsub.f32 %v157, %v266
        %v268 = vand.u32 %v267, 4294901760
        %v269 = vsub.f32 %v267, %v268
        %v270 = vand.u32 %v269, 4294901760
        %271 = vmatpush.msra.mxu0 %v270
        %v272 = vand.u32 %v156, 4294901760
        %v273 = vsub.f32 %v156, %v272
        %v274 = vand.u32 %v273, 4294901760
        %v275 = vsub.f32 %v273, %v274
        %v276 = vand.u32 %v275, 4294901760
        %277 = vmatpush.msra.mxu0 %v276
        %v278 = vand.u32 %v155, 4294901760
        %v279 = vsub.f32 %v155, %v278
        %v280 = vand.u32 %v279, 4294901760
        %v281 = vsub.f32 %v279, %v280
        %v282 = vand.u32 %v281, 4294901760
        %283 = vmatpush.msra.mxu0 %v282
        %v284 = vand.u32 %v184, 4294901760
        %285 = vmatmul.f32.gmra.mxu0 %v284
        %v286 = vpop.f32.mrf.mxu0
        %v287 = vadd.f32 %v222, %v286
        %v288 = vand.u32 %v187, 4294901760
        %289 = vmatmul.f32.gmra.mxu0 %v288
        %v290 = vpop.f32.mrf.mxu0
        %v291 = vadd.f32 %v230, %v290
        %v292 = vand.u32 %v190, 4294901760
        %293 = vmatmul.f32.gmra.mxu0 %v292
        %v294 = vpop.f32.mrf.mxu0
        %v295 = vadd.f32 %v238, %v294
        %v296 = vand.u32 %v193, 4294901760
        %297 = vmatmul.f32.gmra.mxu0 %v296
        %v298 = vpop.f32.mrf.mxu0
        %v299 = vadd.f32 %v246, %v298
        %300 = vdwg.mxu0
        %301 = vmatpush.msra.mxu0 0.0
        %302 = vmatpush.msra.mxu0 0.0
        %303 = vmatpush.msra.mxu0 0.0
        %304 = vmatpush.msra.mxu0 0.0
        %305 = vmatpush.msra.mxu0 0.0
        %306 = vmatpush.msra.mxu0 0.0
        %307 = vmatpush.msra.mxu0 0.0
        %308 = vmatpush.msra.mxu0 0.0
        %309 = vmatpush.msra.mxu0 0.0
        %310 = vmatpush.msra.mxu0 0.0
        %311 = vmatpush.msra.mxu0 0.0
        %312 = vmatpush.msra.mxu0 0.0
        %v313 = vand.u32 %v158, 4294901760
        %v314 = vsub.f32 %v158, %v313
        %315 = vmatpush.msra.mxu0 %v314
        %v316 = vand.u32 %v157, 4294901760
        %v317 = vsub.f32 %v157, %v316
        %318 = vmatpush.msra.mxu0 %v317
        %v319 = vand.u32 %v156, 4294901760
        %v320 = vsub.f32 %v156, %v319
        %321 = vmatpush.msra.mxu0 %v320
        %v322 = vand.u32 %v155, 4294901760
        %v323 = vsub.f32 %v155, %v322
        %324 = vmatpush.msra.mxu0 %v323
        %v325 = vand.u32 %v184, 4294901760
        %v326 = vsub.f32 %v184, %v325
        %327 = vmatmul.f32.gmra.mxu0 %v326
        %v328 = vpop.f32.mrf.mxu0
        %v329 = vadd.f32 %v287, %v328
        %v330 = vand.u32 %v187, 4294901760
        %v331 = vsub.f32 %v187, %v330
        %332 = vmatmul.f32.gmra.mxu0 %v331
        %v333 = vpop.f32.mrf.mxu0
        %v334 = vadd.f32 %v291, %v333
        %v335 = vand.u32 %v190, 4294901760
        %v336 = vsub.f32 %v190, %v335
        %337 = vmatmul.f32.gmra.mxu0 %v336
        %v338 = vpop.f32.mrf.mxu0
        %v339 = vadd.f32 %v295, %v338
        %v340 = vand.u32 %v193, 4294901760
        %v341 = vsub.f32 %v193, %v340
        %342 = vmatmul.f32.gmra.mxu0 %v341
        %v343 = vpop.f32.mrf.mxu0
        %v344 = vadd.f32 %v299, %v343
        %345 = vdwg.mxu0
        %346 = vmatpush.msra.mxu0 0.0
        %347 = vmatpush.msra.mxu0 0.0
        %348 = vmatpush.msra.mxu0 0.0
        %349 = vmatpush.msra.mxu0 0.0
        %350 = vmatpush.msra.mxu0 0.0
        %351 = vmatpush.msra.mxu0 0.0
        %352 = vmatpush.msra.mxu0 0.0
        %353 = vmatpush.msra.mxu0 0.0
        %354 = vmatpush.msra.mxu0 0.0
        %355 = vmatpush.msra.mxu0 0.0
        %356 = vmatpush.msra.mxu0 0.0
        %357 = vmatpush.msra.mxu0 0.0
        %v358 = vand.u32 %v158, 4294901760
        %359 = vmatpush.msra.mxu0 %v358
        %v360 = vand.u32 %v157, 4294901760
        %361 = vmatpush.msra.mxu0 %v360
        %v362 = vand.u32 %v156, 4294901760
        %363 = vmatpush.msra.mxu0 %v362
        %v364 = vand.u32 %v155, 4294901760
        %365 = vmatpush.msra.mxu0 %v364
        %v366 = vand.u32 %v184, 4294901760
        %v367 = vsub.f32 %v184, %v366
        %v368 = vand.u32 %v367, 4294901760
        %369 = vmatmul.f32.gmra.mxu0 %v368
        %v370 = vpop.f32.mrf.mxu0
        %v371 = vadd.f32 %v329, %v370
        %v372 = vand.u32 %v187, 4294901760
        %v373 = vsub.f32 %v187, %v372
        %v374 = vand.u32 %v373, 4294901760
        %375 = vmatmul.f32.gmra.mxu0 %v374
        %v376 = vpop.f32.mrf.mxu0
        %v377 = vadd.f32 %v334, %v376
        %v378 = vand.u32 %v190, 4294901760
        %v379 = vsub.f32 %v190, %v378
        %v380 = vand.u32 %v379, 4294901760
        %381 = vmatmul.f32.gmra.mxu0 %v380
        %v382 = vpop.f32.mrf.mxu0
        %v383 = vadd.f32 %v339, %v382
        %v384 = vand.u32 %v193, 4294901760
        %v385 = vsub.f32 %v193, %v384
        %v386 = vand.u32 %v385, 4294901760
        %387 = vmatmul.f32.gmra.mxu0 %v386
        %v388 = vpop.f32.mrf.mxu0
        %v389 = vadd.f32 %v344, %v388
        %390 = vdwg.mxu0
        %391 = vmatpush.msra.mxu0 0.0
        %392 = vmatpush.msra.mxu0 0.0
        %393 = vmatpush.msra.mxu0 0.0
        %394 = vmatpush.msra.mxu0 0.0
        %395 = vmatpush.msra.mxu0 0.0
        %396 = vmatpush.msra.mxu0 0.0
        %397 = vmatpush.msra.mxu0 0.0
        %398 = vmatpush.msra.mxu0 0.0
        %399 = vmatpush.msra.mxu0 0.0
        %400 = vmatpush.msra.mxu0 0.0
        %401 = vmatpush.msra.mxu0 0.0
        %402 = vmatpush.msra.mxu0 0.0
        %v403 = vand.u32 %v158, 4294901760
        %v404 = vsub.f32 %v158, %v403
        %v405 = vand.u32 %v404, 4294901760
        %406 = vmatpush.msra.mxu0 %v405
        %v407 = vand.u32 %v157, 4294901760
        %v408 = vsub.f32 %v157, %v407
        %v409 = vand.u32 %v408, 4294901760
        %410 = vmatpush.msra.mxu0 %v409
        %v411 = vand.u32 %v156, 4294901760
        %v412 = vsub.f32 %v156, %v411
        %v413 = vand.u32 %v412, 4294901760
        %414 = vmatpush.msra.mxu0 %v413
        %v415 = vand.u32 %v155, 4294901760
        %v416 = vsub.f32 %v155, %v415
        %v417 = vand.u32 %v416, 4294901760
        %418 = vmatpush.msra.mxu0 %v417
        %v419 = vand.u32 %v184, 4294901760
        %420 = vmatmul.f32.gmra.mxu0 %v419
        %v421 = vpop.f32.mrf.mxu0
        %v422 = vadd.f32 %v371, %v421
        %v423 = vand.u32 %v187, 4294901760
        %424 = vmatmul.f32.gmra.mxu0 %v423
        %v425 = vpop.f32.mrf.mxu0
        %v426 = vadd.f32 %v377, %v425
        %v427 = vand.u32 %v190, 4294901760
        %428 = vmatmul.f32.gmra.mxu0 %v427
        %v429 = vpop.f32.mrf.mxu0
        %v430 = vadd.f32 %v383, %v429
        %v431 = vand.u32 %v193, 4294901760
        %432 = vmatmul.f32.gmra.mxu0 %v431
        %v433 = vpop.f32.mrf.mxu0
        %v434 = vadd.f32 %v389, %v433
        %435 = vdwg.mxu0
        %436 = vmatpush.msra.mxu0 0.0
        %437 = vmatpush.msra.mxu0 0.0
        %438 = vmatpush.msra.mxu0 0.0
        %439 = vmatpush.msra.mxu0 0.0
        %440 = vmatpush.msra.mxu0 0.0
        %441 = vmatpush.msra.mxu0 0.0
        %442 = vmatpush.msra.mxu0 0.0
        %443 = vmatpush.msra.mxu0 0.0
        %444 = vmatpush.msra.mxu0 0.0
        %445 = vmatpush.msra.mxu0 0.0
        %446 = vmatpush.msra.mxu0 0.0
        %447 = vmatpush.msra.mxu0 0.0
        %v448 = vand.u32 %v158, 4294901760
        %449 = vmatpush.msra.mxu0 %v448
        %v450 = vand.u32 %v157, 4294901760
        %451 = vmatpush.msra.mxu0 %v450
        %v452 = vand.u32 %v156, 4294901760
        %453 = vmatpush.msra.mxu0 %v452
        %v454 = vand.u32 %v155, 4294901760
        %455 = vmatpush.msra.mxu0 %v454
        %v456 = vand.u32 %v184, 4294901760
        %457 = vmatmul.f32.gmra.mxu0 %v456
        %v458 = vpop.f32.mrf.mxu0
        %v459 = vadd.f32 %v422, %v458
        %v460 = vand.u32 %v187, 4294901760
        %461 = vmatmul.f32.gmra.mxu0 %v460
        %v462 = vpop.f32.mrf.mxu0
        %v463 = vadd.f32 %v426, %v462
        %v464 = vand.u32 %v190, 4294901760
        %465 = vmatmul.f32.gmra.mxu0 %v464
        %v466 = vpop.f32.mrf.mxu0
        %v467 = vadd.f32 %v430, %v466
        %v468 = vand.u32 %v193, 4294901760
        %469 = vmatmul.f32.gmra.mxu0 %v468
        %v470 = vpop.f32.mrf.mxu0
        %v471 = vadd.f32 %v434, %v470
        %472 = vdwg.mxu0
        %vm473 = vcmask 64512
        %474 = vst.msk [vmem:[%s138] sm:$0xff] %vm473, %v459
        %475 = vst.msk [vmem:[%s138 + $0x8] sm:$0xff] %vm473, %v463
        %476 = vst.msk [vmem:[%s138 + $0x10] sm:$0xff] %vm473, %v467
        %477 = vst.msk [vmem:[%s138 + $0x18] sm:$0xff] %vm473, %v471
        %478 = vst.msk [vmem:[%s138 + $0x20] sm:$0xff] %vm473, 0.0
        %479 = vst.msk [vmem:[%s138 + $0x28] sm:$0xff] %vm473, 0.0
        %480 = vst.msk [vmem:[%s138 + $0x30] sm:$0xff] %vm473, 0.0
        %481 = vst.msk [vmem:[%s138 + $0x38] sm:$0xff] %vm473, 0.0
        %p482 = scmp.lt.s32.totalorder %s15, 1
        %s483 = scalar_select %p482, %s15, 1
        %s484 = smul.addr %s483, 8
        %s485 = smul.addr %s484, 8
        %s486 = scalar_lea.vmem %s1, %s485
        // Predicated region
        $region29: #{tpu_custom_call.1} parent=23 // pred_check
          %p487 = pneg %p59
        $region30: #{tpu_custom_call.1} parent=23 // pred_check_branch
          %489 = sbr.rel (%p487) target = $region32
        $region31: #{tpu_custom_call.1} parent=23 // pred_region
          _
        $region32: #{tpu_custom_call.1} parent=23 // pred_fallthru
          _
      $region24: #{tpu_custom_call.1} parent=5 // pred_fallthru
        _
      %p490 = scmp.le.s32.totalorder 2, %s10
      // Predicated region
      $region33: #{tpu_custom_call.1} parent=5 // pred_check
        %p491 = pneg %p490
      $region34: #{tpu_custom_call.1} parent=5 // pred_check_branch
        %493 = sbr.rel (%p491) target = $region36
      $region35: #{tpu_custom_call.1} parent=5 // pred_region
        %s494 = ssub.s32 %s10, 2
        // Predicated region
        $region37: #{tpu_custom_call.1} parent=35 // pred_check
          %p495 = pneg %p65
        $region38: #{tpu_custom_call.1} parent=35 // pred_check_branch
          %497 = sbr.rel (%p495) target = $region40
        $region39: #{tpu_custom_call.1} parent=35 // pred_region
          %p498 = scmp.lt.s32.totalorder %s16, 1
          %s499 = scalar_select %p498, %s16, 1
          %s500 = smul.addr %s499, 8
          %s501 = smul.addr %s500, 8
          %s502 = scalar_lea.vmem %s1, %s501
        $region40: #{tpu_custom_call.1} parent=35 // pred_fallthru
          _
      $region36: #{tpu_custom_call.1} parent=5 // pred_fallthru
        _
    $region6: #{tpu_custom_call.1} parent=1 // loop_footer
      %s14 = sadd.s32 1, %s10
    $region7: #{tpu_custom_call.1} parent=1 // loop_footer_branch
      %9 = sbr.rel target = $region3
    $region8: #{tpu_custom_call.1} parent=1 // loop_exit
      _
    %503 = vsyncpa [#allocation3], 1
    %s504 = scalar_lea.sflag [#allocation3], 1
    %505 = vsyncpa %s504, 1

</llo_original>
